<compile_context>
chip_gen: v7x
topology: tpu7x:2x2x1
jax: 0.10.0
libtpu: 0.0.40
codegen_flags: <defaults>
</compile_context>

<pallas_src>
import functools
import math

import jax
import jax.numpy as jnp
from jax.experimental import pallas as pl
from jax.experimental.pallas import tpu as pltpu

_LOG_CLAMP = math.log(1e-44)   # clamp in log space (1e-44 is subnormal in f32)
_LANE = 128


def _pa_kernel_rows(scale_ref, x1_ref, x2_ref, out_ref, *, n_total, block, s2_nonneg):
    """(N, C) layout: one batch-row tile -> partial sum_r log(sum_c softmax1*softmax2)."""
    pid = pl.program_id(0)
    beta1 = scale_ref[0]                      # clamp(beta, 0) >= 0
    beta2 = scale_ref[1]                      # clamp(beta, 0) * preds_2_factor

    x1 = x1_ref[...]                          # (TM, C), native dtype
    x2 = x2_ref[...]

    # m_i = rowmax(scale_i * x_i), computed on the native-dtype input (scale1 >= 0
    # always; the sign of scale2 is known statically, so use rowmin when negative).
    m1 = beta1 * jnp.max(x1, axis=1, keepdims=True).astype(jnp.float32)
    r2 = (jnp.max(x2, axis=1, keepdims=True) if s2_nonneg
          else jnp.min(x2, axis=1, keepdims=True))
    m2 = beta2 * r2.astype(jnp.float32)

    e1 = jnp.exp(beta1 * x1.astype(jnp.float32) - m1)       # (TM, C) f32
    e2 = jnp.exp(beta2 * x2.astype(jnp.float32) - m2)

    # Row-sums on the otherwise-idle MXU (default precision; ~bf16-pass accuracy is
    # ample for a scalar loss); only the two row-maxes use the XLU.
    ones = jnp.ones((e1.shape[1], 1), jnp.float32)
    s1 = jnp.dot(e1, ones, preferred_element_type=jnp.float32)       # (TM, 1)
    s2 = jnp.dot(e2, ones, preferred_element_type=jnp.float32)
    p = jnp.dot(e1 * e2, ones, preferred_element_type=jnp.float32)

    log_ps = jnp.log(p) - jnp.log(s1) - jnp.log(s2)                  # (TM, 1)
    log_ps = jnp.maximum(log_ps, jnp.float32(_LOG_CLAMP))            # == log(max(ps, 1e-44))

    if n_total % block != 0:
        # Mask garbage rows of the ragged last tile (rows stay independent up to here).
        row = jax.lax.broadcasted_iota(jnp.int32, log_ps.shape, 0) + pid * block
        log_ps = jnp.where(row < n_total, log_ps, jnp.float32(0.0))

    out_ref[...] = jnp.broadcast_to(jnp.sum(log_ps), out_ref.shape)


def _pa_kernel_cols(scale_ref, x1_ref, x2_ref, out_ref, *, n_total, block, s2_nonneg):
    """(C, N) layout (batch on the 128-lane axis): one batch-column tile."""
    pid = pl.program_id(0)
    beta1 = scale_ref[0]
    beta2 = scale_ref[1]

    x1 = x1_ref[...]                          # (C, TN), native dtype
    x2 = x2_ref[...]

    m1 = beta1 * jnp.max(x1, axis=0, keepdims=True).astype(jnp.float32)
    r2 = (jnp.max(x2, axis=0, keepdims=True) if s2_nonneg
          else jnp.min(x2, axis=0, keepdims=True))
    m2 = beta2 * r2.astype(jnp.float32)

    e1 = jnp.exp(beta1 * x1.astype(jnp.float32) - m1)
    e2 = jnp.exp(beta2 * x2.astype(jnp.float32) - m2)

    # Class-axis reductions are cheap dense sublane reductions in this layout.
    s1 = jnp.sum(e1, axis=0, keepdims=True)                  # (1, TN)
    s2 = jnp.sum(e2, axis=0, keepdims=True)
    p = jnp.sum(e1 * e2, axis=0, keepdims=True)

    log_ps = jnp.log(p) - jnp.log(s1) - jnp.log(s2)
    log_ps = jnp.maximum(log_ps, jnp.float32(_LOG_CLAMP))

    if n_total % block != 0:
        col = jax.lax.broadcasted_iota(jnp.int32, log_ps.shape, 1) + pid * block
        log_ps = jnp.where(col < n_total, log_ps, jnp.float32(0.0))

    out_ref[...] = jnp.broadcast_to(jnp.sum(log_ps), out_ref.shape)


def _sublane_granule(dtype):
    # Sub-32-bit dtypes pack rows along sublanes: 8 (f32), 16 (bf16), 32 (int8/fp8).
    return max(8, 32 // jnp.dtype(dtype).itemsize)


def _vmem_limit_bytes():
    """Generation-aware scoped-VMEM limit: ~48 MiB on v7x (64 MiB physical), 64 MiB on v5e/v6e."""
    cap = 64 * 1024 * 1024        # safe fallback if the query is unavailable
    try:
        info = pltpu.get_tpu_info()
        cap = int(getattr(info, "vmem_capacity_bytes", cap) or cap)
    except Exception:
        pass
    return min((3 * cap) // 4, 64 * 1024 * 1024)


def _choose_tile(dim, cols, itemsize, granule, vmem_limit):
    """Tile length along the pipelined grid axis, sized by bytes; >= 2 tiles when it matters."""
    budget = int(0.75 * vmem_limit)
    # Per tile element: 2 inputs x 2 pipeline buffers (native dtype) + ~4 full-tile f32 temps.
    bytes_per_elem = 4 * itemsize + 16
    tile_elems = min(budget // bytes_per_elem, (4 * 1024 * 1024) // itemsize)
    t = max(granule, (tile_elems // max(1, cols)) // granule * granule)
    if t >= dim:
        if dim * cols * itemsize <= (2 * 1024 * 1024) or dim <= 2 * granule:
            return dim                            # small input: one full tile is fine
        # Big enough to matter: force >= 2 (aim 4) tiles so the "parallel" grid axis can
        # shard across v7x's two TensorCores and the DMA pipeline overlaps compute.
        t = -(-dim // 4)
        t = max(granule, -(-t // granule) * granule)
        if t >= dim:
            return dim
    return t


def posterior_agreement_forward(preds1, preds2, beta, preds_2_factor=1.0,
                                block=None, layout="auto"):
    """Returns -log_post, shape (1,): PosteriorAgreementKernel.forward after reset()."""
    N, C = preds1.shape
    assert preds2.shape == (N, C), (preds1.shape, preds2.shape)
    dtype = preds1.dtype
    itemsize = jnp.dtype(dtype).itemsize
    preds_2_factor = float(preds_2_factor)

    # beta.data.clamp_(min=0.0); fold preds_2_factor in host-side -> (2,) f32 in SMEM.
    beta_c = jnp.maximum(jnp.asarray(beta, jnp.float32).reshape(()), 0.0)
    scales = jnp.stack([beta_c, beta_c * jnp.float32(preds_2_factor)])
    s2_nonneg = preds_2_factor >= 0.0

    vmem_limit = _vmem_limit_bytes()
    if layout == "auto":
        # C < 128: class axis on the lanes wastes 128/C of every vreg -> go lane-dense.
        layout = "cols" if C < _LANE else "rows"

    cost = pl.CostEstimate(
        flops=int(10 * N * C),
        transcendentals=int(2 * N * C + 3 * N),
        bytes_accessed=int(2 * N * C * itemsize),
    )
    # Independent per-tile partials -> grid axis is "parallel" (megacore-shardable on
    # v7x; measured no-op on single-TC v5e/v6e). If a Mosaic dump ever shows it not
    # sharding across v7x's two TCs, switch to pltpu.CORE_PARALLEL.
    cparams = pltpu.CompilerParams(
        dimension_semantics=("parallel",),
        vmem_limit_bytes=vmem_limit,
    )

    if layout == "cols":
        tile = block if block is not None else _choose_tile(N, C, itemsize, _LANE, vmem_limit)
        num_tiles = -(-N // tile)
        # Host-side layout plumbing: (N, C) -> (C, N) puts the batch on the 128-lane axis.
        x1, x2 = preds1.T, preds2.T
        kernel = functools.partial(_pa_kernel_cols, n_total=N, block=tile, s2_nonneg=s2_nonneg)
        in_specs = [
            pl.BlockSpec(memory_space=pltpu.MemorySpace.SMEM),     # (2,) folded scalars
            pl.BlockSpec((C, tile), lambda i: (0, i)),             # preds1^T tile (pipelined)
            pl.BlockSpec((C, tile), lambda i: (0, i)),             # preds2^T tile (pipelined)
        ]
    else:
        granule = _sublane_granule(dtype)
        tile = block if block is not None else _choose_tile(N, C, itemsize, granule, vmem_limit)
        num_tiles = -(-N // tile)
        x1, x2 = preds1, preds2
        kernel = functools.partial(_pa_kernel_rows, n_total=N, block=tile, s2_nonneg=s2_nonneg)
        in_specs = [
            pl.BlockSpec(memory_space=pltpu.MemorySpace.SMEM),
            pl.BlockSpec((tile, C), lambda i: (i, 0)),
            pl.BlockSpec((tile, C), lambda i: (i, 0)),
        ]

    partials = pl.pallas_call(
        kernel,
        grid=(num_tiles,),
        out_shape=jax.ShapeDtypeStruct((num_tiles, 8, _LANE), jnp.float32),
        in_specs=in_specs,
        # Lane-dense (1, 8, 128) per-tile block -> unmasked vst, layout-safe everywhere.
        out_specs=pl.BlockSpec((1, 8, _LANE), lambda i: (i, 0, 0)),
        compiler_params=cparams,
        cost_estimate=cost,
    )(scales, x1, x2)

    # Tiny final reduction over per-tile partials; forward returns -log_post, shape (1,).
    return (-jnp.sum(partials[:, 0, 0])).reshape(1)


def _reference(preds1, preds2, beta, preds_2_factor=1.0):
    beta = jnp.maximum(jnp.float32(beta), 0.0)
    p1 = jax.nn.softmax(beta * preds1.astype(jnp.float32), axis=1)
    p2 = jax.nn.softmax(beta * jnp.float32(preds_2_factor) * preds2.astype(jnp.float32), axis=1)
    ps = jnp.sum(p1 * p2, axis=1)
    ps = jnp.maximum(ps, 1e-44)
    return (-jnp.sum(jnp.log(ps))).reshape(1)


if __name__ == "__main__":
    key = jax.random.PRNGKey(0)
    k1, k2, k3, k4, k5, k6 = jax.random.split(key, 6)
    beta0 = 1.0

    # Test 1: default lane-dense path (C=32 < 128), single tile, f32.
    N1, C1 = 8, 32
    a1 = jax.random.normal(k1, (N1, C1), dtype=jnp.float32)
    a2 = jax.random.normal(k2, (N1, C1), dtype=jnp.float32)
    out1 = jax.block_until_ready(posterior_agreement_forward(a1, a2, beta0, 1.0))
    ref1 = _reference(a1, a2, beta0, 1.0)
    assert out1.shape == (1,)
    assert jnp.allclose(out1, ref1, rtol=1e-5, atol=1e-4), (out1, ref1)

    # Test 2: row-layout path forced, multi-tile pipelined grid with ragged last tile,
    # preds_2_factor != 1. Looser tolerance: the MXU row-sums use default matmul precision.
    N2, C2 = 20, 32
    b1 = jax.random.normal(k3, (N2, C2), dtype=jnp.float32)
    b2 = 1.5 * jax.random.normal(k4, (N2, C2), dtype=jnp.float32)
    out2 = jax.block_until_ready(
        posterior_agreement_forward(b1, b2, beta0, 0.5, block=8, layout="rows"))
    ref2 = _reference(b1, b2, beta0, 0.5)
    assert out2.shape == (1,)
    assert jnp.allclose(out2, ref2, rtol=1e-2, atol=1e-2), (out2, ref2)

    # Test 3: lane-dense path, multi-tile ragged columns, negative preds_2_factor
    # (exercises the rowmin branch), bf16 inputs (exercises native-dtype streaming).
    N3, C3 = 300, 16
    c1 = jax.random.normal(k5, (N3, C3), dtype=jnp.float32).astype(jnp.bfloat16)
    c2 = jax.random.normal(k6, (N3, C3), dtype=jnp.float32).astype(jnp.bfloat16)
    out3 = jax.block_until_ready(
        posterior_agreement_forward(c1, c2, 0.8, -0.7, block=128, layout="cols"))
    ref3 = _reference(c1, c2, 0.8, -0.7)
    assert out3.shape == (1,)
    assert jnp.allclose(out3, ref3, rtol=1e-4, atol=5e-2), (out3, ref3)

    # Test 4: auto-selected row path (C=128 -> class axis already lane-dense), single tile.
    N4, C4 = 24, 128
    d1 = jax.random.normal(k1, (N4, C4), dtype=jnp.float32)
    d2 = jax.random.normal(k2, (N4, C4), dtype=jnp.float32)
    out4 = jax.block_until_ready(posterior_agreement_forward(d1, d2, beta0, 1.0))
    ref4 = _reference(d1, d2, beta0, 1.0)
    assert out4.shape == (1,)
    assert jnp.allclose(out4, ref4, rtol=1e-2, atol=1e-2), (out4, ref4)

    # TODO(synk): the stateful log_post accumulation / reset() / evaluate() bookkeeping and
    # the backward-grad nan_to_num register_hook are host-side / autograd concerns, not
    # forward kernel ops.

    print("KERNEL_OK")
</pallas_src>

<mosaic_0001>
module attributes {stable_mosaic.version = 11 : i64} {
  func.func @_pa_kernel_cols(%arg0: i32, %arg1: memref<2xf32, #tpu.memory_space<smem>>, %arg2: memref<32x8xf32, #tpu.memory_space<vmem>>, %arg3: memref<32x8xf32, #tpu.memory_space<vmem>>, %arg4: memref<1x8x128xf32, #tpu.memory_space<vmem>>) attributes {dimension_semantics = [#tpu.dimension_semantics<parallel>], iteration_bounds = array<i64: 1>, scalar_prefetch = 0 : i64, scratch_operands = 0 : i64, tpu.core_type = #tpu.core_type<tc>, window_params = [{transform_indices = @transform_0, window_bounds = array<i64: 2>}, {transform_indices = @transform_1, window_bounds = array<i64: 32, 8>}, {transform_indices = @transform_2, window_bounds = array<i64: 32, 8>}, {transform_indices = @transform_3, window_bounds = array<i64: 1, 8, 128>}]} {
    %c0 = arith.constant 0 : index
    %0 = memref.load %arg1[%c0] : memref<2xf32, #tpu.memory_space<smem>>
    %c1 = arith.constant 1 : index
    %1 = memref.load %arg1[%c1] : memref<2xf32, #tpu.memory_space<smem>>
    %c0_0 = arith.constant 0 : index
    %c0_1 = arith.constant 0 : index
    %2 = vector.load %arg2[%c0_0, %c0_1] : memref<32x8xf32, #tpu.memory_space<vmem>>, vector<32x8xf32>
    %c0_2 = arith.constant 0 : index
    %c0_3 = arith.constant 0 : index
    %3 = vector.load %arg3[%c0_2, %c0_3] : memref<32x8xf32, #tpu.memory_space<vmem>>, vector<32x8xf32>
    %cst = arith.constant dense<0xFF800000> : vector<8xf32>
    %4 = vector.multi_reduction <maximumf>, %2, %cst [0] : vector<32x8xf32> to vector<8xf32>
    %5 = vector.shape_cast %4 : vector<8xf32> to vector<1x8xf32>
    %6 = vector.broadcast %0 : f32 to vector<1x8xf32>
    %7 = arith.mulf %6, %5 : vector<1x8xf32>
    %cst_4 = arith.constant dense<0xFF800000> : vector<8xf32>
    %8 = vector.multi_reduction <maximumf>, %3, %cst_4 [0] : vector<32x8xf32> to vector<8xf32>
    %9 = vector.shape_cast %8 : vector<8xf32> to vector<1x8xf32>
    %10 = vector.broadcast %1 : f32 to vector<1x8xf32>
    %11 = arith.mulf %10, %9 : vector<1x8xf32>
    %12 = vector.broadcast %0 : f32 to vector<32x8xf32>
    %13 = arith.mulf %12, %2 : vector<32x8xf32>
    %14 = vector.broadcast %7 : vector<1x8xf32> to vector<32x8xf32>
    %15 = arith.subf %13, %14 : vector<32x8xf32>
    %16 = math.exp %15 : vector<32x8xf32>
    %17 = vector.broadcast %1 : f32 to vector<32x8xf32>
    %18 = arith.mulf %17, %3 : vector<32x8xf32>
    %19 = vector.broadcast %11 : vector<1x8xf32> to vector<32x8xf32>
    %20 = arith.subf %18, %19 : vector<32x8xf32>
    %21 = math.exp %20 : vector<32x8xf32>
    %cst_5 = arith.constant dense<0.000000e+00> : vector<8xf32>
    %22 = vector.multi_reduction <add>, %16, %cst_5 [0] : vector<32x8xf32> to vector<8xf32>
    %23 = vector.shape_cast %22 : vector<8xf32> to vector<1x8xf32>
    %cst_6 = arith.constant dense<0.000000e+00> : vector<8xf32>
    %24 = vector.multi_reduction <add>, %21, %cst_6 [0] : vector<32x8xf32> to vector<8xf32>
    %25 = vector.shape_cast %24 : vector<8xf32> to vector<1x8xf32>
    %26 = arith.mulf %16, %21 : vector<32x8xf32>
    %cst_7 = arith.constant dense<0.000000e+00> : vector<8xf32>
    %27 = vector.multi_reduction <add>, %26, %cst_7 [0] : vector<32x8xf32> to vector<8xf32>
    %28 = vector.shape_cast %27 : vector<8xf32> to vector<1x8xf32>
    %29 = math.log %28 : vector<1x8xf32>
    %30 = math.log %23 : vector<1x8xf32>
    %31 = arith.subf %29, %30 : vector<1x8xf32>
    %32 = math.log %25 : vector<1x8xf32>
    %33 = arith.subf %31, %32 : vector<1x8xf32>
    %cst_8 = arith.constant -101.313744 : f32
    %34 = vector.broadcast %cst_8 : f32 to vector<1x8xf32>
    %35 = arith.maximumf %33, %34 : vector<1x8xf32>
    %36 = vector.shape_cast %35 : vector<1x8xf32> to vector<1x1x8xf32>
    %cst_9 = arith.constant dense<0.000000e+00> : vector<1xf32>
    %37 = vector.multi_reduction <add>, %36, %cst_9 [1, 2] : vector<1x1x8xf32> to vector<1xf32>
    %38 = vector.shape_cast %37 : vector<1xf32> to vector<1x1x1xf32>
    %39 = vector.extract %38[0, 0, 0] : f32 from vector<1x1x1xf32>
    %40 = vector.broadcast %39 : f32 to vector<1x8x128xf32>
    %c0_10 = arith.constant 0 : index
    %c0_11 = arith.constant 0 : index
    %c0_12 = arith.constant 0 : index
    %41 = vector.load %arg4[%c0_10, %c0_11, %c0_12] : memref<1x8x128xf32, #tpu.memory_space<vmem>>, vector<1x8x128xf32>
    tpu.vector_store %arg4[%c0_10, %c0_11, %c0_12], %40 {strides = array<i32>} : memref<1x8x128xf32, #tpu.memory_space<vmem>>, vector<1x8x128xf32>,
    return
  }
  func.func @transform_0(%arg0: i32) -> i32 {
    %c0_i32 = arith.constant 0 : i32
    %c0_i32_0 = arith.constant 0 : i32
    return %c0_i32 : i32
  }
  func.func @transform_1(%arg0: i32) -> (i32, i32) {
    %c0_i32 = arith.constant 0 : i32
    %c0_i32_0 = arith.constant 0 : i32
    return %c0_i32, %arg0 : i32, i32
  }
  func.func @transform_2(%arg0: i32) -> (i32, i32) {
    %c0_i32 = arith.constant 0 : i32
    %c0_i32_0 = arith.constant 0 : i32
    return %c0_i32, %arg0 : i32, i32
  }
  func.func @transform_3(%arg0: i32) -> (i32, i32, i32) {
    %c0_i32 = arith.constant 0 : i32
    %c0_i32_0 = arith.constant 0 : i32
    %c0_i32_1 = arith.constant 0 : i32
    return %arg0, %c0_i32, %c0_i32_0 : i32, i32, i32
  }
}

</mosaic_0001>

<llo_original>
// kernel: tpu_custom_call.1
$region0: #{tpu_custom_call.1}
  #allocation0 [shape = 'u32[]', space=smem, size = 0x4, offset = 0x4, fixed_abs, tag = 'smem constant byte address 0x4 - core index']
  #allocation1 [shape = 'u32[144,128]{1,0:T(1,128)}', space=vmem, size = 0x12000, scoped, tag = 'internal scratch']
  %s0 = inlined_call_operand.vmem [shape: f32[2], index: 0, kind: input, shape index: {}]
  %s1 = inlined_call_operand.vmem [shape: f32[32,8], index: 1, kind: input, shape index: {}]
  %s2 = inlined_call_operand.vmem [shape: f32[32,8], index: 2, kind: input, shape index: {}]
  %s3 = inlined_call_operand.hbm [shape: f32[1,8,128], index: 3, kind: output, shape index: {}]
  %s4 = sld [smem:[#allocation0]]
  $region26: #{tpu_custom_call.1} parent=0
    _
  %s6 = ssub.s32 1, %s4
  %s7 = scalar_select 0, %s6, %s4
  $region1: #{tpu_custom_call.1} parent=0
    #allocation2 [shape = 'u8[512]{0}', space=smem, size = 0x200, scoped, tag = 'input window, operand 0, single buffered']
    #allocation3 [shape = 's32[1]{0}', space=sflag, size = 0x4, scoped, tag = 'scoped memory for tpu_custom_call.1']
    #allocation4 [shape = 's32[1]{0}', space=sflag, size = 0x4, scoped, tag = 'scoped memory for tpu_custom_call.1']
    #allocation5 [shape = 'u8[4096]{0}', space=vmem, size = 0x1000, scoped, tag = 'output window, operand 0, single buffered']
    %8 = vsyncpa [#allocation4], 0
    %9 = vsyncpa [#allocation3], 0
    // Predicated region
    $region2: #{tpu_custom_call.1} parent=1 // pred_check
      _
    $region3: #{tpu_custom_call.1} parent=1 // pred_check_branch
      %11 = sbr.rel (0) target = $region5
    $region4: #{tpu_custom_call.1} parent=1 // pred_region
      %s13 = ssub.s32 16, 16
      %14 = vsyncadd [#allocation4], %s13
      %s16 = sshll.u32 %s0, 4
      %s17 = int_to_ptr.vmem [resolvable:$true] %s16
      %19 = dma.vmem_to_smem %s17, 16, [#allocation2], [#allocation4]
    $region5: #{tpu_custom_call.1} parent=1 // pred_fallthru
      _
    // Predicated region
    $region6: #{tpu_custom_call.1} parent=1 // pred_check
      _
    $region7: #{tpu_custom_call.1} parent=1 // pred_check_branch
      %21 = sbr.rel (0) target = $region9
    $region8: #{tpu_custom_call.1} parent=1 // pred_region
      _
    $region9: #{tpu_custom_call.1} parent=1 // pred_fallthru
      _
    // Predicated region
    $region10: #{tpu_custom_call.1} parent=1 // pred_check
      _
    $region11: #{tpu_custom_call.1} parent=1 // pred_check_branch
      %23 = sbr.rel (0) target = $region13
    $region12: #{tpu_custom_call.1} parent=1 // pred_region
      _
    $region13: #{tpu_custom_call.1} parent=1 // pred_fallthru
      _
    // Predicated region
    $region14: #{tpu_custom_call.1} parent=1 // pred_check
      _
    $region15: #{tpu_custom_call.1} parent=1 // pred_check_branch
      %25 = sbr.rel (0) target = $region17
    $region16: #{tpu_custom_call.1} parent=1 // pred_region
      %26 = dma.done [#allocation4], 16
    $region17: #{tpu_custom_call.1} parent=1 // pred_fallthru
      _
    %27 = sfence
    %s28 = sld [smem:[#allocation2]]
    %s29 = sld [smem:[#allocation2 + $0x1]]
    %v30 = vld [vmem:[%s1] sm:$0xff]
    %v31 = vld [vmem:[%s1 + $0x8] sm:$0xff]
    %v32 = vld [vmem:[%s1 + $0x10] sm:$0xff]
    %v33 = vld [vmem:[%s1 + $0x18] sm:$0xff]
    %v34 = vld [vmem:[%s2] sm:$0xff]
    %v35 = vld [vmem:[%s2 + $0x8] sm:$0xff]
    %v36 = vld [vmem:[%s2 + $0x10] sm:$0xff]
    %v37 = vld [vmem:[%s2 + $0x18] sm:$0xff]
    %vm38 = vcmask 64512
    %v39 = vsel %vm38, %v30, -inf
    %v40 = vsel %vm38, %v31, -inf
    %v41 = vsel %vm38, %v32, -inf
    %v42 = vsel %vm38, %v33, -inf
    %v43 = vmax.f32 %v39, %v40
    %v44 = vmax.f32 %v41, %v42
    %v45 = vmax.f32 %v43, %v44
    %v46 = vrot.slane %v45, 4
    %v47 = vmax.f32 %v45, %v46
    %v48 = vrot.slane %v47, 2
    %v49 = vmax.f32 %v47, %v48
    %v50 = vrot.slane %v49, 1
    %v51 = vmax.f32 %v49, %v50
    %v52 = vstv %s28
    %v53 = vmul.f32 %v52, %v51
    %v54 = vsel %vm38, %v34, -inf
    %v55 = vsel %vm38, %v35, -inf
    %v56 = vsel %vm38, %v36, -inf
    %v57 = vsel %vm38, %v37, -inf
    %v58 = vmax.f32 %v54, %v55
    %v59 = vmax.f32 %v56, %v57
    %v60 = vmax.f32 %v58, %v59
    %v61 = vrot.slane %v60, 4
    %v62 = vmax.f32 %v60, %v61
    %v63 = vrot.slane %v62, 2
    %v64 = vmax.f32 %v62, %v63
    %v65 = vrot.slane %v64, 1
    %v66 = vmax.f32 %v64, %v65
    %v67 = vstv %s29
    %v68 = vmul.f32 %v67, %v66
    %v69 = vmul.f32 %v52, %v30
    %v70 = vmul.f32 %v52, %v31
    %v71 = vmul.f32 %v52, %v32
    %v72 = vmul.f32 %v52, %v33
    %v73 = vsub.f32 %v69, %v53
    %v74 = vsub.f32 %v70, %v53
    %v75 = vsub.f32 %v71, %v53
    %v76 = vsub.f32 %v72, %v53
    %v77 = vmul.f32 %v73, 1.442695
    %v78 = vpow.pop %v77
    %v79 = vmul.f32 %v74, 1.442695
    %v80 = vpow.pop %v79
    %v81 = vmul.f32 %v75, 1.442695
    %v82 = vpow.pop %v81
    %v83 = vmul.f32 %v76, 1.442695
    %v84 = vpow.pop %v83
    %v85 = vmul.f32 %v67, %v34
    %v86 = vmul.f32 %v67, %v35
    %v87 = vmul.f32 %v67, %v36
    %v88 = vmul.f32 %v67, %v37
    %v89 = vsub.f32 %v85, %v68
    %v90 = vsub.f32 %v86, %v68
    %v91 = vsub.f32 %v87, %v68
    %v92 = vsub.f32 %v88, %v68
    %v93 = vmul.f32 %v89, 1.442695
    %v94 = vpow.pop %v93
    %v95 = vmul.f32 %v90, 1.442695
    %v96 = vpow.pop %v95
    %v97 = vmul.f32 %v91, 1.442695
    %v98 = vpow.pop %v97
    %v99 = vmul.f32 %v92, 1.442695
    %v100 = vpow.pop %v99
    %v101 = vsel %vm38, %v78, 0.0
    %v102 = vsel %vm38, %v80, 0.0
    %v103 = vadd.f32 %v101, %v102
    %v104 = vsel %vm38, %v82, 0.0
    %v105 = vadd.f32 %v103, %v104
    %v106 = vsel %vm38, %v84, 0.0
    %v107 = vadd.f32 %v105, %v106
    %v108 = vrot.slane %v107, 4
    %v109 = vadd.f32 %v107, %v108
    %v110 = vrot.slane %v109, 2
    %v111 = vadd.f32 %v109, %v110
    %v112 = vrot.slane %v111, 1
    %v113 = vadd.f32 %v111, %v112
    %v114 = vsel %vm38, %v94, 0.0
    %v115 = vsel %vm38, %v96, 0.0
    %v116 = vadd.f32 %v114, %v115
    %v117 = vsel %vm38, %v98, 0.0
    %v118 = vadd.f32 %v116, %v117
    %v119 = vsel %vm38, %v100, 0.0
    %v120 = vadd.f32 %v118, %v119
    %v121 = vrot.slane %v120, 4
    %v122 = vadd.f32 %v120, %v121
    %v123 = vrot.slane %v122, 2
    %v124 = vadd.f32 %v122, %v123
    %v125 = vrot.slane %v124, 1
    %v126 = vadd.f32 %v124, %v125
    %v127 = vmul.f32 %v78, %v94
    %v128 = vmul.f32 %v80, %v96
    %v129 = vmul.f32 %v82, %v98
    %v130 = vmul.f32 %v84, %v100
    %v131 = vsel %vm38, %v127, 0.0
    %v132 = vsel %vm38, %v128, 0.0
    %v133 = vadd.f32 %v131, %v132
    %v134 = vsel %vm38, %v129, 0.0
    %v135 = vadd.f32 %v133, %v134
    %v136 = vsel %vm38, %v130, 0.0
    %v137 = vadd.f32 %v135, %v136
    %v138 = vrot.slane %v137, 4
    %v139 = vadd.f32 %v137, %v138
    %v140 = vrot.slane %v139, 2
    %v141 = vadd.f32 %v139, %v140
    %v142 = vrot.slane %v141, 1
    %v143 = vadd.f32 %v141, %v142
    %v144 = vlog2.pop %v143
    %v145 = vmul.f32 %v144, 0.6931472
    %v146 = vlog2.pop %v113
    %v147 = vmul.f32 %v146, 0.6931472
    %v148 = vsub.f32 %v145, %v147
    %v149 = vlog2.pop %v126
    %v150 = vmul.f32 %v149, 0.6931472
    %v151 = vsub.f32 %v148, %v150
    %v152 = vmax.f32 %v151, -101.31374
    %vm153 = vcmask 57344
    %v154 = vsel %vm153, %v152, 0.0
    %155 = vadd.xlane.f32.xlu0 %v154
    %v156 = vpop.xlane.xlu0 %155
    %v157 = vrot.slane %v156, 4
    %v158 = vadd.f32 %v156, %v157
    %v159 = vrot.slane %v158, 2
    %v160 = vadd.f32 %v158, %v159
    %v161 = vrot.slane %v160, 1
    %v162 = vadd.f32 %v160, %v161
    %s163 = vtos %v162
    %v164 = vstv %s163
    %165 = vst [vmem:[#allocation5] sm:$0xff] %v164
    // Predicated region
    $region18: #{tpu_custom_call.1} parent=1 // pred_check
      _
    $region19: #{tpu_custom_call.1} parent=1 // pred_check_branch
      %167 = sbr.rel (0) target = $region21
    $region20: #{tpu_custom_call.1} parent=1 // pred_region
      %s169 = ssub.s32 128, 128
      %170 = vsyncadd [#allocation3], %s169
      %s172 = sshll.u32 [#allocation5], 4
      %s173 = int_to_ptr.vmem [resolvable:$true] %s172
      %175 = dma.vmem_to_hbm [thread:$0]  %s173, 128, %s3, [#allocation3]
    $region21: #{tpu_custom_call.1} parent=1 // pred_fallthru
      _
    // Predicated region
    $region22: #{tpu_custom_call.1} parent=1 // pred_check
      _
    $region23: #{tpu_custom_call.1} parent=1 // pred_check_branch
      %177 = sbr.rel (0) target = $region25
    $region24: #{tpu_custom_call.1} parent=1 // pred_region
      %178 = dma.done [#allocation3], 128
    $region25: #{tpu_custom_call.1} parent=1 // pred_fallthru
      _
    %179 = vsyncpa [#allocation3], 1
    %180 = vsyncpa [#allocation4], 1

</llo_original>
